<compile_context>
chip_gen: v6e
topology: v6e:2x2x1
jax: 0.10.0
libtpu: 0.0.40
codegen_flags: <defaults>
</compile_context>

<pallas_src>
import jax
import jax.numpy as jnp
from jax.experimental import pallas as pl
from jax.experimental.pallas import tpu as pltpu

# ----------------------------- model dims -----------------------------------
B = 2          # batch
T = 8          # sequence length (observation times)
DATA_DIM = 4   # data_dim
S = 4          # n_states
P = 2          # n_proc
H = 32         # encoder hidden
HD = 32        # decoder hidden

DIN = DATA_DIM + 2          # [x, t, dt]
PS = P * S                  # flattened (proc, state)
SP_DIM = PS + 1             # sample_param = [z, t]
DEC_DIM = 2 * DATA_DIM      # decoder outputs mean & logvar per data dim
OUT_DIM = PS + SP_DIM + DEC_DIM   # fused row-wise output slab [q_obs | sample_param | dec_param]

M = B * T                   # flattened rows
IN_DIM = DIN + PS           # fused input slab [x, t, dt, gumbel]


# ----------------------------- fused kernel ----------------------------------
def _vaemjp_kernel(tau_ref,
                   inp_ref,
                   w1_ref, b1_ref, w2_ref, b2_ref, w3_ref, b3_ref,
                   wd1_ref, bd1_ref, wd2_ref, bd2_ref,
                   out_ref, q0_ref):
    inv_tau = 1.0 / tau_ref[0]                              # hoisted scalar reciprocal

    inp = inp_ref[...]                                      # [M, IN_DIM]
    x = inp[:, :DIN]                                        # [M, DIN]  ([x, t, dt])
    g = inp[:, DIN:DIN + PS]                                # [M, PS]   (gumbel noise)
    t_col = inp[:, DATA_DIM:DATA_DIM + 1]                   # [M, 1]    (obs times)

    # encoder hidden
    h = jnp.tanh(jnp.dot(x, w1_ref[...],
                         preferred_element_type=jnp.float32) + b1_ref[...])   # [M, H]

    logits = jnp.dot(h, w2_ref[...],
                     preferred_element_type=jnp.float32) + b2_ref[...]        # [M, PS]

    # grouped (per-process) softmaxes, assembled in registers and stored once
    q_parts = []
    z_parts = []
    for p in range(P):
        lo, hi = p * S, (p + 1) * S
        lg = logits[:, lo:hi]                               # [M, S]

        # marginal posterior q_obs
        m = jnp.max(lg, axis=-1, keepdims=True)
        e = jnp.exp(lg - m)
        q_parts.append(e * pl.reciprocal(jnp.sum(e, axis=-1, keepdims=True),
                                         approx=False))

        # Gumbel-softmax relaxed sample at temperature tau
        pert = (lg + g[:, lo:hi]) * inv_tau
        m2 = jnp.max(pert, axis=-1, keepdims=True)
        e2 = jnp.exp(pert - m2)
        z_parts.append(e2 * pl.reciprocal(jnp.sum(e2, axis=-1, keepdims=True),
                                          approx=False))

    q_all = jnp.concatenate(q_parts, axis=-1)               # [M, PS]
    sp = jnp.concatenate(z_parts + [t_col], axis=-1)        # [M, SP_DIM] sample_param = [z, t]

    # decoder — single MXU matmul over the full sample_param
    hd = jnp.tanh(jnp.dot(sp, wd1_ref[...],
                          preferred_element_type=jnp.float32) + bd1_ref[...])  # [M, HD]
    dec = jnp.dot(hd, wd2_ref[...],
                  preferred_element_type=jnp.float32) + bd2_ref[...]           # [M, DEC_DIM]

    # one lane-dense store for all row-wise outputs
    out_ref[...] = jnp.concatenate([q_all, sp, dec], axis=-1)

    # fused q0: mean of h over T per batch element, then per-process softmax
    pooled = jnp.concatenate(
        [jnp.mean(h[b * T:(b + 1) * T, :], axis=0, keepdims=True) for b in range(B)],
        axis=0)                                             # [B, H]
    logits0 = jnp.dot(pooled, w3_ref[...],
                      preferred_element_type=jnp.float32) + b3_ref[...]        # [B, PS]
    q0_parts = []
    for p in range(P):
        lo, hi = p * S, (p + 1) * S
        lg0 = logits0[:, lo:hi]
        m0 = jnp.max(lg0, axis=-1, keepdims=True)
        e0 = jnp.exp(lg0 - m0)
        q0_parts.append(e0 * pl.reciprocal(jnp.sum(e0, axis=-1, keepdims=True),
                                           approx=False))
    q0_ref[...] = jnp.concatenate(q0_parts, axis=-1)        # single store


# ------------------------------- wrapper -------------------------------------
@jax.jit
def vaemjp_forward(x, t, dt, tau, gumbel, params):
    """x:[B,T,D], t:[B,T,1], dt:[B,T,1], tau:[1], gumbel:[B,T,P*S]."""
    inp = jnp.concatenate(
        [x.reshape(M, DATA_DIM), t.reshape(M, 1), dt.reshape(M, 1),
         gumbel.reshape(M, PS)],
        axis=-1).astype(jnp.float32)                        # [M, IN_DIM]
    tau = tau.astype(jnp.float32)

    (w1, b1, w2, b2, w3, b3, wd1, bd1, wd2, bd2) = params

    full = lambda shape: pl.BlockSpec(shape, lambda i: tuple(0 for _ in shape))

    out_flat, q0_flat = pl.pallas_call(
        _vaemjp_kernel,
        out_shape=(
            jax.ShapeDtypeStruct((M, OUT_DIM), jnp.float32),
            jax.ShapeDtypeStruct((B, PS), jnp.float32),
        ),
        grid_spec=pltpu.PrefetchScalarGridSpec(
            num_scalar_prefetch=0,
            grid=(1,),
            in_specs=[
                pl.BlockSpec(memory_space=pltpu.MemorySpace.SMEM),   # tau (scalar)
                full((M, IN_DIM)),                                   # [x,t,dt,gumbel]
                full((DIN, H)), full((1, H)),                        # W1, b1
                full((H, PS)), full((1, PS)),                        # W2, b2
                full((H, PS)), full((1, PS)),                        # W3, b3
                full((SP_DIM, HD)), full((1, HD)),                   # Wd1, bd1
                full((HD, DEC_DIM)), full((1, DEC_DIM)),             # Wd2, bd2
            ],
            out_specs=[
                full((M, OUT_DIM)),
                full((B, PS)),
            ],
        ),
        compiler_params=pltpu.CompilerParams(
            dimension_semantics=("arbitrary",)),
    )(tau, inp, w1, b1, w2, b2, w3, b3, wd1, bd1, wd2, bd2)

    q_obs = out_flat[:, :PS].reshape(B, T, P, S)
    sample_param = out_flat[:, PS:PS + SP_DIM].reshape(B, T, SP_DIM)
    dec_param = out_flat[:, PS + SP_DIM:].reshape(B, T, DEC_DIM)
    q0 = q0_flat.reshape(B, P, S)
    return dec_param, sample_param, q_obs, q0


def init_params(key):
    ks = jax.random.split(key, 10)
    sc = 0.2
    w1 = sc * jax.random.normal(ks[0], (DIN, H), jnp.float32)
    b1 = sc * jax.random.normal(ks[1], (1, H), jnp.float32)
    w2 = sc * jax.random.normal(ks[2], (H, PS), jnp.float32)
    b2 = sc * jax.random.normal(ks[3], (1, PS), jnp.float32)
    w3 = sc * jax.random.normal(ks[4], (H, PS), jnp.float32)
    b3 = sc * jax.random.normal(ks[5], (1, PS), jnp.float32)
    wd1 = sc * jax.random.normal(ks[6], (SP_DIM, HD), jnp.float32)
    bd1 = sc * jax.random.normal(ks[7], (1, HD), jnp.float32)
    wd2 = sc * jax.random.normal(ks[8], (HD, DEC_DIM), jnp.float32)
    bd2 = sc * jax.random.normal(ks[9], (1, DEC_DIM), jnp.float32)
    return (w1, b1, w2, b2, w3, b3, wd1, bd1, wd2, bd2)


if __name__ == "__main__":
    key = jax.random.PRNGKey(0)
    k_x, k_g, k_p = jax.random.split(key, 3)

    x = jax.random.normal(k_x, (B, T, DATA_DIM), jnp.float32)
    t = jnp.broadcast_to(jnp.linspace(0.0, 1.0, T)[None, :, None], (B, T, 1)).astype(jnp.float32)
    dt = jnp.full((B, T, 1), 1.0 / T, jnp.float32)
    tau = jnp.array([1.0], jnp.float32)

    u = jax.random.uniform(k_g, (B, T, PS), jnp.float32, minval=1e-6, maxval=1.0 - 1e-6)
    gumbel = -jnp.log(-jnp.log(u))

    params = init_params(k_p)

    dec_param, sample_param, q_obs, q0 = vaemjp_forward(x, t, dt, tau, gumbel, params)
    jax.block_until_ready((dec_param, sample_param, q_obs, q0))

    assert dec_param.shape == (B, T, DEC_DIM)
    assert sample_param.shape == (B, T, SP_DIM)
    assert q_obs.shape == (B, T, P, S)
    assert q0.shape == (B, P, S)
    # posterior marginals / relaxed samples / initial dist must be valid distributions
    assert jnp.allclose(jnp.sum(q_obs, axis=-1), 1.0, atol=1e-5)
    assert jnp.allclose(jnp.sum(sample_param[..., :PS].reshape(B, T, P, S), axis=-1), 1.0, atol=1e-5)
    assert jnp.allclose(jnp.sum(q0, axis=-1), 1.0, atol=1e-5)
    # sample_param last column carries the observation times
    assert jnp.allclose(sample_param[..., PS], t[..., 0], atol=1e-6)

    print("KERNEL_OK")
</pallas_src>

<mosaic_0001>
module attributes {stable_mosaic.version = 11 : i64} {
  func.func @_vaemjp_kernel(%arg0: i32, %arg1: memref<1xf32, #tpu.memory_space<smem>>, %arg2: memref<16x14xf32, #tpu.memory_space<vmem>>, %arg3: memref<6x32xf32, #tpu.memory_space<vmem>>, %arg4: memref<1x32xf32, #tpu.memory_space<vmem>>, %arg5: memref<32x8xf32, #tpu.memory_space<vmem>>, %arg6: memref<1x8xf32, #tpu.memory_space<vmem>>, %arg7: memref<32x8xf32, #tpu.memory_space<vmem>>, %arg8: memref<1x8xf32, #tpu.memory_space<vmem>>, %arg9: memref<9x32xf32, #tpu.memory_space<vmem>>, %arg10: memref<1x32xf32, #tpu.memory_space<vmem>>, %arg11: memref<32x8xf32, #tpu.memory_space<vmem>>, %arg12: memref<1x8xf32, #tpu.memory_space<vmem>>, %arg13: memref<16x25xf32, #tpu.memory_space<vmem>>, %arg14: memref<2x8xf32, #tpu.memory_space<vmem>>) attributes {dimension_semantics = [#tpu.dimension_semantics<arbitrary>], iteration_bounds = array<i64: 1>, scalar_prefetch = 0 : i64, scratch_operands = 0 : i64, tpu.core_type = #tpu.core_type<tc>, window_params = [{transform_indices = @transform_0, window_bounds = array<i64: 1>}, {pipeline_mode = #tpu.pipeline_mode<synchronous>, transform_indices = @transform_1, window_bounds = array<i64: 16, 14>}, {pipeline_mode = #tpu.pipeline_mode<synchronous>, transform_indices = @transform_2, window_bounds = array<i64: 6, 32>}, {pipeline_mode = #tpu.pipeline_mode<synchronous>, transform_indices = @transform_3, window_bounds = array<i64: 1, 32>}, {pipeline_mode = #tpu.pipeline_mode<synchronous>, transform_indices = @transform_4, window_bounds = array<i64: 32, 8>}, {pipeline_mode = #tpu.pipeline_mode<synchronous>, transform_indices = @transform_5, window_bounds = array<i64: 1, 8>}, {pipeline_mode = #tpu.pipeline_mode<synchronous>, transform_indices = @transform_6, window_bounds = array<i64: 32, 8>}, {pipeline_mode = #tpu.pipeline_mode<synchronous>, transform_indices = @transform_7, window_bounds = array<i64: 1, 8>}, {pipeline_mode = #tpu.pipeline_mode<synchronous>, transform_indices = @transform_8, window_bounds = array<i64: 9, 32>}, {pipeline_mode = #tpu.pipeline_mode<synchronous>, transform_indices = @transform_9, window_bounds = array<i64: 1, 32>}, {pipeline_mode = #tpu.pipeline_mode<synchronous>, transform_indices = @transform_10, window_bounds = array<i64: 32, 8>}, {pipeline_mode = #tpu.pipeline_mode<synchronous>, transform_indices = @transform_11, window_bounds = array<i64: 1, 8>}, {pipeline_mode = #tpu.pipeline_mode<synchronous>, transform_indices = @transform_12, window_bounds = array<i64: 16, 25>}, {pipeline_mode = #tpu.pipeline_mode<synchronous>, transform_indices = @transform_13, window_bounds = array<i64: 2, 8>}]} {
    %c0 = arith.constant 0 : index
    %0 = memref.load %arg1[%c0] : memref<1xf32, #tpu.memory_space<smem>>
    %cst = arith.constant 1.000000e+00 : f32
    %1 = arith.divf %cst, %0 : f32
    %c0_0 = arith.constant 0 : index
    %c0_1 = arith.constant 0 : index
    %2 = vector.load %arg2[%c0_0, %c0_1] : memref<16x14xf32, #tpu.memory_space<vmem>>, vector<16x14xf32>
    %3 = vector.extract_strided_slice %2 {offsets = [0, 0], sizes = [16, 6], strides = [1, 1]} : vector<16x14xf32> to vector<16x6xf32>
    %4 = vector.extract_strided_slice %2 {offsets = [0, 6], sizes = [16, 8], strides = [1, 1]} : vector<16x14xf32> to vector<16x8xf32>
    %5 = vector.extract_strided_slice %2 {offsets = [0, 4], sizes = [16, 1], strides = [1, 1]} : vector<16x14xf32> to vector<16x1xf32>
    %c0_2 = arith.constant 0 : index
    %c0_3 = arith.constant 0 : index
    %6 = vector.load %arg3[%c0_2, %c0_3] : memref<6x32xf32, #tpu.memory_space<vmem>>, vector<6x32xf32>
    %cst_4 = arith.constant dense<0.000000e+00> : vector<16x32xf32>
    %7 = tpu.matmul %3, %6, %cst_4 {dimension_numbers = #tpu.dot_dimension_numbers<[1], [0], [0], [1], [0, 0, 1, 1], [], []>} : vector<16x6xf32>, vector<6x32xf32>, vector<16x32xf32> -> vector<16x32xf32>
    %c0_5 = arith.constant 0 : index
    %c0_6 = arith.constant 0 : index
    %8 = vector.load %arg4[%c0_5, %c0_6] : memref<1x32xf32, #tpu.memory_space<vmem>>, vector<1x32xf32>
    %9 = vector.broadcast %8 : vector<1x32xf32> to vector<16x32xf32>
    %10 = arith.addf %7, %9 : vector<16x32xf32>
    %11 = math.tanh %10 : vector<16x32xf32>
    %c0_7 = arith.constant 0 : index
    %c0_8 = arith.constant 0 : index
    %12 = vector.load %arg5[%c0_7, %c0_8] : memref<32x8xf32, #tpu.memory_space<vmem>>, vector<32x8xf32>
    %cst_9 = arith.constant dense<0.000000e+00> : vector<16x8xf32>
    %13 = tpu.matmul %11, %12, %cst_9 {dimension_numbers = #tpu.dot_dimension_numbers<[1], [0], [0], [1], [0, 0, 1, 1], [], []>} : vector<16x32xf32>, vector<32x8xf32>, vector<16x8xf32> -> vector<16x8xf32>
    %c0_10 = arith.constant 0 : index
    %c0_11 = arith.constant 0 : index
    %14 = vector.load %arg6[%c0_10, %c0_11] : memref<1x8xf32, #tpu.memory_space<vmem>>, vector<1x8xf32>
    %15 = vector.broadcast %14 : vector<1x8xf32> to vector<16x8xf32>
    %16 = arith.addf %13, %15 : vector<16x8xf32>
    %17 = vector.extract_strided_slice %16 {offsets = [0, 0], sizes = [16, 4], strides = [1, 1]} : vector<16x8xf32> to vector<16x4xf32>
    %cst_12 = arith.constant dense<0xFF800000> : vector<16xf32>
    %18 = vector.multi_reduction <maximumf>, %17, %cst_12 [1] : vector<16x4xf32> to vector<16xf32>
    %19 = vector.shape_cast %18 : vector<16xf32> to vector<16x1xf32>
    %20 = vector.broadcast %19 : vector<16x1xf32> to vector<16x4xf32>
    %21 = arith.subf %17, %20 : vector<16x4xf32>
    %22 = math.exp %21 : vector<16x4xf32>
    %cst_13 = arith.constant dense<0.000000e+00> : vector<16xf32>
    %23 = vector.multi_reduction <add>, %22, %cst_13 [1] : vector<16x4xf32> to vector<16xf32>
    %24 = vector.shape_cast %23 : vector<16xf32> to vector<16x1xf32>
    %25 = tpu.reciprocal %24 : vector<16x1xf32> -> vector<16x1xf32>
    %26 = vector.broadcast %25 : vector<16x1xf32> to vector<16x4xf32>
    %27 = arith.mulf %22, %26 : vector<16x4xf32>
    %28 = vector.extract_strided_slice %4 {offsets = [0, 0], sizes = [16, 4], strides = [1, 1]} : vector<16x8xf32> to vector<16x4xf32>
    %29 = arith.addf %17, %28 : vector<16x4xf32>
    %30 = vector.broadcast %1 : f32 to vector<16x4xf32>
    %31 = arith.mulf %29, %30 : vector<16x4xf32>
    %cst_14 = arith.constant dense<0xFF800000> : vector<16xf32>
    %32 = vector.multi_reduction <maximumf>, %31, %cst_14 [1] : vector<16x4xf32> to vector<16xf32>
    %33 = vector.shape_cast %32 : vector<16xf32> to vector<16x1xf32>
    %34 = vector.broadcast %33 : vector<16x1xf32> to vector<16x4xf32>
    %35 = arith.subf %31, %34 : vector<16x4xf32>
    %36 = math.exp %35 : vector<16x4xf32>
    %cst_15 = arith.constant dense<0.000000e+00> : vector<16xf32>
    %37 = vector.multi_reduction <add>, %36, %cst_15 [1] : vector<16x4xf32> to vector<16xf32>
    %38 = vector.shape_cast %37 : vector<16xf32> to vector<16x1xf32>
    %39 = tpu.reciprocal %38 : vector<16x1xf32> -> vector<16x1xf32>
    %40 = vector.broadcast %39 : vector<16x1xf32> to vector<16x4xf32>
    %41 = arith.mulf %36, %40 : vector<16x4xf32>
    %42 = vector.extract_strided_slice %16 {offsets = [0, 4], sizes = [16, 4], strides = [1, 1]} : vector<16x8xf32> to vector<16x4xf32>
    %cst_16 = arith.constant dense<0xFF800000> : vector<16xf32>
    %43 = vector.multi_reduction <maximumf>, %42, %cst_16 [1] : vector<16x4xf32> to vector<16xf32>
    %44 = vector.shape_cast %43 : vector<16xf32> to vector<16x1xf32>
    %45 = vector.broadcast %44 : vector<16x1xf32> to vector<16x4xf32>
    %46 = arith.subf %42, %45 : vector<16x4xf32>
    %47 = math.exp %46 : vector<16x4xf32>
    %cst_17 = arith.constant dense<0.000000e+00> : vector<16xf32>
    %48 = vector.multi_reduction <add>, %47, %cst_17 [1] : vector<16x4xf32> to vector<16xf32>
    %49 = vector.shape_cast %48 : vector<16xf32> to vector<16x1xf32>
    %50 = tpu.reciprocal %49 : vector<16x1xf32> -> vector<16x1xf32>
    %51 = vector.broadcast %50 : vector<16x1xf32> to vector<16x4xf32>
    %52 = arith.mulf %47, %51 : vector<16x4xf32>
    %53 = vector.extract_strided_slice %4 {offsets = [0, 4], sizes = [16, 4], strides = [1, 1]} : vector<16x8xf32> to vector<16x4xf32>
    %54 = arith.addf %42, %53 : vector<16x4xf32>
    %55 = vector.broadcast %1 : f32 to vector<16x4xf32>
    %56 = arith.mulf %54, %55 : vector<16x4xf32>
    %cst_18 = arith.constant dense<0xFF800000> : vector<16xf32>
    %57 = vector.multi_reduction <maximumf>, %56, %cst_18 [1] : vector<16x4xf32> to vector<16xf32>
    %58 = vector.shape_cast %57 : vector<16xf32> to vector<16x1xf32>
    %59 = vector.broadcast %58 : vector<16x1xf32> to vector<16x4xf32>
    %60 = arith.subf %56, %59 : vector<16x4xf32>
    %61 = math.exp %60 : vector<16x4xf32>
    %cst_19 = arith.constant dense<0.000000e+00> : vector<16xf32>
    %62 = vector.multi_reduction <add>, %61, %cst_19 [1] : vector<16x4xf32> to vector<16xf32>
    %63 = vector.shape_cast %62 : vector<16xf32> to vector<16x1xf32>
    %64 = tpu.reciprocal %63 : vector<16x1xf32> -> vector<16x1xf32>
    %65 = vector.broadcast %64 : vector<16x1xf32> to vector<16x4xf32>
    %66 = arith.mulf %61, %65 : vector<16x4xf32>
    %67 = tpu.concatenate %27, %52 in 1 : vector<16x4xf32>, vector<16x4xf32> -> vector<16x8xf32>
    %68 = tpu.concatenate %41, %66, %5 in 1 : vector<16x4xf32>, vector<16x4xf32>, vector<16x1xf32> -> vector<16x9xf32>
    %c0_20 = arith.constant 0 : index
    %c0_21 = arith.constant 0 : index
    %69 = vector.load %arg9[%c0_20, %c0_21] : memref<9x32xf32, #tpu.memory_space<vmem>>, vector<9x32xf32>
    %cst_22 = arith.constant dense<0.000000e+00> : vector<16x32xf32>
    %70 = tpu.matmul %68, %69, %cst_22 {dimension_numbers = #tpu.dot_dimension_numbers<[1], [0], [0], [1], [0, 0, 1, 1], [], []>} : vector<16x9xf32>, vector<9x32xf32>, vector<16x32xf32> -> vector<16x32xf32>
    %c0_23 = arith.constant 0 : index
    %c0_24 = arith.constant 0 : index
    %71 = vector.load %arg10[%c0_23, %c0_24] : memref<1x32xf32, #tpu.memory_space<vmem>>, vector<1x32xf32>
    %72 = vector.broadcast %71 : vector<1x32xf32> to vector<16x32xf32>
    %73 = arith.addf %70, %72 : vector<16x32xf32>
    %74 = math.tanh %73 : vector<16x32xf32>
    %c0_25 = arith.constant 0 : index
    %c0_26 = arith.constant 0 : index
    %75 = vector.load %arg11[%c0_25, %c0_26] : memref<32x8xf32, #tpu.memory_space<vmem>>, vector<32x8xf32>
    %cst_27 = arith.constant dense<0.000000e+00> : vector<16x8xf32>
    %76 = tpu.matmul %74, %75, %cst_27 {dimension_numbers = #tpu.dot_dimension_numbers<[1], [0], [0], [1], [0, 0, 1, 1], [], []>} : vector<16x32xf32>, vector<32x8xf32>, vector<16x8xf32> -> vector<16x8xf32>
    %c0_28 = arith.constant 0 : index
    %c0_29 = arith.constant 0 : index
    %77 = vector.load %arg12[%c0_28, %c0_29] : memref<1x8xf32, #tpu.memory_space<vmem>>, vector<1x8xf32>
    %78 = vector.broadcast %77 : vector<1x8xf32> to vector<16x8xf32>
    %79 = arith.addf %76, %78 : vector<16x8xf32>
    %80 = tpu.concatenate %67, %68, %79 in 1 : vector<16x8xf32>, vector<16x9xf32>, vector<16x8xf32> -> vector<16x25xf32>
    %c0_30 = arith.constant 0 : index
    %c0_31 = arith.constant 0 : index
    %81 = vector.load %arg13[%c0_30, %c0_31] : memref<16x25xf32, #tpu.memory_space<vmem>>, vector<16x25xf32>
    tpu.vector_store %arg13[%c0_30, %c0_31], %80 {strides = array<i32>} : memref<16x25xf32, #tpu.memory_space<vmem>>, vector<16x25xf32>,
    %82 = vector.extract_strided_slice %11 {offsets = [0, 0], sizes = [8, 32], strides = [1, 1]} : vector<16x32xf32> to vector<8x32xf32>
    %cst_32 = arith.constant dense<0.000000e+00> : vector<32xf32>
    %83 = vector.multi_reduction <add>, %82, %cst_32 [0] : vector<8x32xf32> to vector<32xf32>
    %84 = vector.shape_cast %83 : vector<32xf32> to vector<1x32xf32>
    %cst_33 = arith.constant 8.000000e+00 : f32
    %85 = vector.broadcast %cst_33 : f32 to vector<1x32xf32>
    %86 = arith.divf %84, %85 : vector<1x32xf32>
    %87 = vector.extract_strided_slice %11 {offsets = [8, 0], sizes = [8, 32], strides = [1, 1]} : vector<16x32xf32> to vector<8x32xf32>
    %cst_34 = arith.constant dense<0.000000e+00> : vector<32xf32>
    %88 = vector.multi_reduction <add>, %87, %cst_34 [0] : vector<8x32xf32> to vector<32xf32>
    %89 = vector.shape_cast %88 : vector<32xf32> to vector<1x32xf32>
    %cst_35 = arith.constant 8.000000e+00 : f32
    %90 = vector.broadcast %cst_35 : f32 to vector<1x32xf32>
    %91 = arith.divf %89, %90 : vector<1x32xf32>
    %92 = tpu.concatenate %86, %91 in 0 : vector<1x32xf32>, vector<1x32xf32> -> vector<2x32xf32>
    %c0_36 = arith.constant 0 : index
    %c0_37 = arith.constant 0 : index
    %93 = vector.load %arg7[%c0_36, %c0_37] : memref<32x8xf32, #tpu.memory_space<vmem>>, vector<32x8xf32>
    %cst_38 = arith.constant dense<0.000000e+00> : vector<2x8xf32>
    %94 = tpu.matmul %92, %93, %cst_38 {dimension_numbers = #tpu.dot_dimension_numbers<[1], [0], [0], [1], [0, 0, 1, 1], [], []>} : vector<2x32xf32>, vector<32x8xf32>, vector<2x8xf32> -> vector<2x8xf32>
    %c0_39 = arith.constant 0 : index
    %c0_40 = arith.constant 0 : index
    %95 = vector.load %arg8[%c0_39, %c0_40] : memref<1x8xf32, #tpu.memory_space<vmem>>, vector<1x8xf32>
    %96 = vector.broadcast %95 : vector<1x8xf32> to vector<2x8xf32>
    %97 = arith.addf %94, %96 : vector<2x8xf32>
    %98 = vector.extract_strided_slice %97 {offsets = [0, 0], sizes = [2, 4], strides = [1, 1]} : vector<2x8xf32> to vector<2x4xf32>
    %cst_41 = arith.constant dense<0xFF800000> : vector<2xf32>
    %99 = vector.multi_reduction <maximumf>, %98, %cst_41 [1] : vector<2x4xf32> to vector<2xf32>
    %100 = vector.shape_cast %99 : vector<2xf32> to vector<2x1xf32>
    %101 = vector.broadcast %100 : vector<2x1xf32> to vector<2x4xf32>
    %102 = arith.subf %98, %101 : vector<2x4xf32>
    %103 = math.exp %102 : vector<2x4xf32>
    %cst_42 = arith.constant dense<0.000000e+00> : vector<2xf32>
    %104 = vector.multi_reduction <add>, %103, %cst_42 [1] : vector<2x4xf32> to vector<2xf32>
    %105 = vector.shape_cast %104 : vector<2xf32> to vector<2x1xf32>
    %106 = tpu.reciprocal %105 : vector<2x1xf32> -> vector<2x1xf32>
    %107 = vector.broadcast %106 : vector<2x1xf32> to vector<2x4xf32>
    %108 = arith.mulf %103, %107 : vector<2x4xf32>
    %109 = vector.extract_strided_slice %97 {offsets = [0, 4], sizes = [2, 4], strides = [1, 1]} : vector<2x8xf32> to vector<2x4xf32>
    %cst_43 = arith.constant dense<0xFF800000> : vector<2xf32>
    %110 = vector.multi_reduction <maximumf>, %109, %cst_43 [1] : vector<2x4xf32> to vector<2xf32>
    %111 = vector.shape_cast %110 : vector<2xf32> to vector<2x1xf32>
    %112 = vector.broadcast %111 : vector<2x1xf32> to vector<2x4xf32>
    %113 = arith.subf %109, %112 : vector<2x4xf32>
    %114 = math.exp %113 : vector<2x4xf32>
    %cst_44 = arith.constant dense<0.000000e+00> : vector<2xf32>
    %115 = vector.multi_reduction <add>, %114, %cst_44 [1] : vector<2x4xf32> to vector<2xf32>
    %116 = vector.shape_cast %115 : vector<2xf32> to vector<2x1xf32>
    %117 = tpu.reciprocal %116 : vector<2x1xf32> -> vector<2x1xf32>
    %118 = vector.broadcast %117 : vector<2x1xf32> to vector<2x4xf32>
    %119 = arith.mulf %114, %118 : vector<2x4xf32>
    %120 = tpu.concatenate %108, %119 in 1 : vector<2x4xf32>, vector<2x4xf32> -> vector<2x8xf32>
    %c0_45 = arith.constant 0 : index
    %c0_46 = arith.constant 0 : index
    %121 = vector.load %arg14[%c0_45, %c0_46] : memref<2x8xf32, #tpu.memory_space<vmem>>, vector<2x8xf32>
    tpu.vector_store %arg14[%c0_45, %c0_46], %120 {strides = array<i32>} : memref<2x8xf32, #tpu.memory_space<vmem>>, vector<2x8xf32>,
    return
  }
  func.func @transform_0(%arg0: i32) -> i32 {
    %c0_i32 = arith.constant 0 : i32
    %c0_i32_0 = arith.constant 0 : i32
    return %c0_i32 : i32
  }
  func.func @transform_1(%arg0: i32) -> (i32, i32) {
    %c0_i32 = arith.constant 0 : i32
    %c0_i32_0 = arith.constant 0 : i32
    %c0_i32_1 = arith.constant 0 : i32
    return %c0_i32, %c0_i32_0 : i32, i32
  }
  func.func @transform_2(%arg0: i32) -> (i32, i32) {
    %c0_i32 = arith.constant 0 : i32
    %c0_i32_0 = arith.constant 0 : i32
    %c0_i32_1 = arith.constant 0 : i32
    return %c0_i32, %c0_i32_0 : i32, i32
  }
  func.func @transform_3(%arg0: i32) -> (i32, i32) {
    %c0_i32 = arith.constant 0 : i32
    %c0_i32_0 = arith.constant 0 : i32
    %c0_i32_1 = arith.constant 0 : i32
    return %c0_i32, %c0_i32_0 : i32, i32
  }
  func.func @transform_4(%arg0: i32) -> (i32, i32) {
    %c0_i32 = arith.constant 0 : i32
    %c0_i32_0 = arith.constant 0 : i32
    %c0_i32_1 = arith.constant 0 : i32
    return %c0_i32, %c0_i32_0 : i32, i32
  }
  func.func @transform_5(%arg0: i32) -> (i32, i32) {
    %c0_i32 = arith.constant 0 : i32
    %c0_i32_0 = arith.constant 0 : i32
    %c0_i32_1 = arith.constant 0 : i32
    return %c0_i32, %c0_i32_0 : i32, i32
  }
  func.func @transform_6(%arg0: i32) -> (i32, i32) {
    %c0_i32 = arith.constant 0 : i32
    %c0_i32_0 = arith.constant 0 : i32
    %c0_i32_1 = arith.constant 0 : i32
    return %c0_i32, %c0_i32_0 : i32, i32
  }
  func.func @transform_7(%arg0: i32) -> (i32, i32) {
    %c0_i32 = arith.constant 0 : i32
    %c0_i32_0 = arith.constant 0 : i32
    %c0_i32_1 = arith.constant 0 : i32
    return %c0_i32, %c0_i32_0 : i32, i32
  }
  func.func @transform_8(%arg0: i32) -> (i32, i32) {
    %c0_i32 = arith.constant 0 : i32
    %c0_i32_0 = arith.constant 0 : i32
    %c0_i32_1 = arith.constant 0 : i32
    return %c0_i32, %c0_i32_0 : i32, i32
  }
  func.func @transform_9(%arg0: i32) -> (i32, i32) {
    %c0_i32 = arith.constant 0 : i32
    %c0_i32_0 = arith.constant 0 : i32
    %c0_i32_1 = arith.constant 0 : i32
    return %c0_i32, %c0_i32_0 : i32, i32
  }
  func.func @transform_10(%arg0: i32) -> (i32, i32) {
    %c0_i32 = arith.constant 0 : i32
    %c0_i32_0 = arith.constant 0 : i32
    %c0_i32_1 = arith.constant 0 : i32
    return %c0_i32, %c0_i32_0 : i32, i32
  }
  func.func @transform_11(%arg0: i32) -> (i32, i32) {
    %c0_i32 = arith.constant 0 : i32
    %c0_i32_0 = arith.constant 0 : i32
    %c0_i32_1 = arith.constant 0 : i32
    return %c0_i32, %c0_i32_0 : i32, i32
  }
  func.func @transform_12(%arg0: i32) -> (i32, i32) {
    %c0_i32 = arith.constant 0 : i32
    %c0_i32_0 = arith.constant 0 : i32
    %c0_i32_1 = arith.constant 0 : i32
    return %c0_i32, %c0_i32_0 : i32, i32
  }
  func.func @transform_13(%arg0: i32) -> (i32, i32) {
    %c0_i32 = arith.constant 0 : i32
    %c0_i32_0 = arith.constant 0 : i32
    %c0_i32_1 = arith.constant 0 : i32
    return %c0_i32, %c0_i32_0 : i32, i32
  }
}

</mosaic_0001>

<llo_original>
// kernel: vaemjp_forward.1
$region0: #{vaemjp_forward.1}
  #allocation0 [shape = 'u32[]', space=smem, size = 0x4, offset = 0x4, fixed_abs, tag = 'smem constant byte address 0x4 - core index']
  #allocation1 [shape = 'u32[144,128]{1,0:T(1,128)}', space=vmem, size = 0x12000, scoped, tag = 'internal scratch']
  #allocation2 [shape = 'f32[1]{0:T(128)S(6)}', space=smem, size = 0x200, scoped, tag = 'scoped memory for vaemjp_forward.1']
  %s0 = inlined_call_operand.<no memory space> [shape: f32[1], index: 0, kind: input, shape index: {}]
  %s1 = inlined_call_operand.vmem [shape: f32[16,14], index: 1, kind: input, shape index: {}]
  %s2 = inlined_call_operand.vmem [shape: f32[6,32], index: 2, kind: input, shape index: {}]
  %s3 = inlined_call_operand.vmem [shape: f32[1,32], index: 3, kind: input, shape index: {}]
  %s4 = inlined_call_operand.vmem [shape: f32[32,8], index: 4, kind: input, shape index: {}]
  %s5 = inlined_call_operand.vmem [shape: f32[1,8], index: 5, kind: input, shape index: {}]
  %s6 = inlined_call_operand.vmem [shape: f32[32,8], index: 6, kind: input, shape index: {}]
  %s7 = inlined_call_operand.vmem [shape: f32[1,8], index: 7, kind: input, shape index: {}]
  %s8 = inlined_call_operand.vmem [shape: f32[9,32], index: 8, kind: input, shape index: {}]
  %s9 = inlined_call_operand.vmem [shape: f32[1,32], index: 9, kind: input, shape index: {}]
  %s10 = inlined_call_operand.vmem [shape: f32[32,8], index: 10, kind: input, shape index: {}]
  %s11 = inlined_call_operand.vmem [shape: f32[1,8], index: 11, kind: input, shape index: {}]
  %s12 = inlined_call_operand.vmem [shape: f32[16,25], index: 12, kind: output, shape index: {0}]
  %s13 = inlined_call_operand.vmem [shape: f32[2,8], index: 13, kind: output, shape index: {1}]
  %14 = xla_tuple %s12, %s13
  %s15 = sld [smem:[#allocation0]]
  $region66: #{vaemjp_forward.1} parent=0
    _
  %s17 = ssub.s32 1, %s15
  %s18 = scalar_select 0, %s17, %s15
  %19 = sst [smem:[#allocation2]] %s0
  // Predicated region
  $region2: #{vaemjp_forward.1} parent=0 // pred_check
    _
  $region3: #{vaemjp_forward.1} parent=0 // pred_check_branch
    %21 = sbr.rel (0) target = $region5
  $region4: #{vaemjp_forward.1} parent=0 // pred_region
    _
  $region5: #{vaemjp_forward.1} parent=0 // pred_fallthru
    _
  // Predicated region
  $region6: #{vaemjp_forward.1} parent=0 // pred_check
    _
  $region7: #{vaemjp_forward.1} parent=0 // pred_check_branch
    %23 = sbr.rel (0) target = $region9
  $region8: #{vaemjp_forward.1} parent=0 // pred_region
    _
  $region9: #{vaemjp_forward.1} parent=0 // pred_fallthru
    _
  // Predicated region
  $region10: #{vaemjp_forward.1} parent=0 // pred_check
    _
  $region11: #{vaemjp_forward.1} parent=0 // pred_check_branch
    %25 = sbr.rel (0) target = $region13
  $region12: #{vaemjp_forward.1} parent=0 // pred_region
    _
  $region13: #{vaemjp_forward.1} parent=0 // pred_fallthru
    _
  // Predicated region
  $region14: #{vaemjp_forward.1} parent=0 // pred_check
    _
  $region15: #{vaemjp_forward.1} parent=0 // pred_check_branch
    %27 = sbr.rel (0) target = $region17
  $region16: #{vaemjp_forward.1} parent=0 // pred_region
    _
  $region17: #{vaemjp_forward.1} parent=0 // pred_fallthru
    _
  // Predicated region
  $region18: #{vaemjp_forward.1} parent=0 // pred_check
    _
  $region19: #{vaemjp_forward.1} parent=0 // pred_check_branch
    %29 = sbr.rel (0) target = $region21
  $region20: #{vaemjp_forward.1} parent=0 // pred_region
    _
  $region21: #{vaemjp_forward.1} parent=0 // pred_fallthru
    _
  // Predicated region
  $region22: #{vaemjp_forward.1} parent=0 // pred_check
    _
  $region23: #{vaemjp_forward.1} parent=0 // pred_check_branch
    %31 = sbr.rel (0) target = $region25
  $region24: #{vaemjp_forward.1} parent=0 // pred_region
    _
  $region25: #{vaemjp_forward.1} parent=0 // pred_fallthru
    _
  // Predicated region
  $region26: #{vaemjp_forward.1} parent=0 // pred_check
    _
  $region27: #{vaemjp_forward.1} parent=0 // pred_check_branch
    %33 = sbr.rel (0) target = $region29
  $region28: #{vaemjp_forward.1} parent=0 // pred_region
    _
  $region29: #{vaemjp_forward.1} parent=0 // pred_fallthru
    _
  // Predicated region
  $region30: #{vaemjp_forward.1} parent=0 // pred_check
    _
  $region31: #{vaemjp_forward.1} parent=0 // pred_check_branch
    %35 = sbr.rel (0) target = $region33
  $region32: #{vaemjp_forward.1} parent=0 // pred_region
    _
  $region33: #{vaemjp_forward.1} parent=0 // pred_fallthru
    _
  // Predicated region
  $region34: #{vaemjp_forward.1} parent=0 // pred_check
    _
  $region35: #{vaemjp_forward.1} parent=0 // pred_check_branch
    %37 = sbr.rel (0) target = $region37
  $region36: #{vaemjp_forward.1} parent=0 // pred_region
    _
  $region37: #{vaemjp_forward.1} parent=0 // pred_fallthru
    _
  // Predicated region
  $region38: #{vaemjp_forward.1} parent=0 // pred_check
    _
  $region39: #{vaemjp_forward.1} parent=0 // pred_check_branch
    %39 = sbr.rel (0) target = $region41
  $region40: #{vaemjp_forward.1} parent=0 // pred_region
    _
  $region41: #{vaemjp_forward.1} parent=0 // pred_fallthru
    _
  // Predicated region
  $region42: #{vaemjp_forward.1} parent=0 // pred_check
    _
  $region43: #{vaemjp_forward.1} parent=0 // pred_check_branch
    %41 = sbr.rel (0) target = $region45
  $region44: #{vaemjp_forward.1} parent=0 // pred_region
    _
  $region45: #{vaemjp_forward.1} parent=0 // pred_fallthru
    _
  // Predicated region
  $region46: #{vaemjp_forward.1} parent=0 // pred_check
    _
  $region47: #{vaemjp_forward.1} parent=0 // pred_check_branch
    %43 = sbr.rel (0) target = $region49
  $region48: #{vaemjp_forward.1} parent=0 // pred_region
    _
  $region49: #{vaemjp_forward.1} parent=0 // pred_fallthru
    _
  %s44 = sld [smem:[#allocation2]]
  %v45 = vstv %s44
  %v46 = vrcp.pop %v45
  %s47 = vtos %v46
  %v48 = vld [vmem:[%s1] sm:$0xff]
  %v49 = vld [vmem:[%s1 + $0x8] sm:$0xff]
  %v50 = vld [vmem:[%s2] sm:$0x3f]
  %v51 = vld [vmem:[%s3] sm:$0x1]
  %v53 = vlaneseq
  %v54 = vshrl.u32 %v53, 7
  %v55 = vsub.s32 0, %v54
  %v56 = vrot.slane %v51, %v55
  %vm58 = vcmask 48128
  %v60 = vsel %vm58, %v48, 0
  %v63 = vsel %vm58, %v49, 0
  %vm65 = vcmask 1045504
  %v67 = vsel %vm65, %v50, 0
  %69 = vmatprep.subr.mxu0 0.0
  %70 = vmatpush1.msra.mxu0 0.0
  %71 = vmatprep.subr.mxu0 0.0
  %72 = vmatpush1.msra.mxu0 0.0
  %73 = vmatprep.subr.mxu0 0.0
  %74 = vmatpush1.msra.mxu0 0.0
  %75 = vmatprep.subr.mxu0 0.0
  %76 = vmatpush1.msra.mxu0 0.0
  %77 = vmatprep.subr.mxu0 0.0
  %78 = vmatpush1.msra.mxu0 0.0
  %79 = vmatprep.subr.mxu0 0.0
  %80 = vmatpush1.msra.mxu0 0.0
  %81 = vmatprep.subr.mxu0 0.0
  %82 = vmatpush1.msra.mxu0 0.0
  %83 = vmatprep.subr.mxu0 0.0
  %84 = vmatpush1.msra.mxu0 0.0
  %85 = vmatprep.subr.mxu0 0.0
  %86 = vmatpush1.msra.mxu0 0.0
  %87 = vmatprep.subr.mxu0 0.0
  %88 = vmatpush1.msra.mxu0 0.0
  %89 = vmatprep.subr.mxu0 0.0
  %90 = vmatpush1.msra.mxu0 0.0
  %91 = vmatprep.subr.mxu0 0.0
  %92 = vmatpush1.msra.mxu0 0.0
  %93 = vmatprep.subr.mxu0 0.0
  %94 = vmatpush1.msra.mxu0 0.0
  %95 = vmatprep.subr.mxu0 0.0
  %96 = vmatpush1.msra.mxu0 0.0
  %97 = vmatprep.subr.mxu0 0.0
  %98 = vmatpush1.msra.mxu0 0.0
  %99 = vmatprep.subr.mxu0 0.0
  %100 = vmatpush1.msra.mxu0 %v67
  %101 = vmatprep.subr.mxu0 0.0
  %102 = vmatpush2.msra.mxu0 0.0
  %103 = vmatprep.subr.mxu0 0.0
  %104 = vmatpush2.msra.mxu0 0.0
  %105 = vmatprep.subr.mxu0 0.0
  %106 = vmatpush2.msra.mxu0 0.0
  %107 = vmatprep.subr.mxu0 0.0
  %108 = vmatpush2.msra.mxu0 0.0
  %109 = vmatprep.subr.mxu0 0.0
  %110 = vmatpush2.msra.mxu0 0.0
  %111 = vmatprep.subr.mxu0 0.0
  %112 = vmatpush2.msra.mxu0 0.0
  %113 = vmatprep.subr.mxu0 0.0
  %114 = vmatpush2.msra.mxu0 0.0
  %115 = vmatprep.subr.mxu0 0.0
  %116 = vmatpush2.msra.mxu0 0.0
  %117 = vmatprep.subr.mxu0 0.0
  %118 = vmatpush2.msra.mxu0 0.0
  %119 = vmatprep.subr.mxu0 0.0
  %120 = vmatpush2.msra.mxu0 0.0
  %121 = vmatprep.subr.mxu0 0.0
  %122 = vmatpush2.msra.mxu0 0.0
  %123 = vmatprep.subr.mxu0 0.0
  %124 = vmatpush2.msra.mxu0 0.0
  %125 = vmatprep.subr.mxu0 0.0
  %126 = vmatpush2.msra.mxu0 0.0
  %127 = vmatprep.subr.mxu0 0.0
  %128 = vmatpush2.msra.mxu0 0.0
  %129 = vmatprep.subr.mxu0 0.0
  %130 = vmatpush2.msra.mxu0 0.0
  %131 = vmatprep.subr.mxu0 0.0
  %132 = vmatpush2.msra.mxu0 0.0
  %133 = vmatprep.mubr.f32.mxu0 0.0
  %134 = vmatmul.mubr.f32.gmra.mxu0 %v60
  %v135 = vpop.f32.mrf.mxu0
  %v136 = vadd.f32 %v56, %v135
  %v137 = vpop.f32.mrf.mxu0
  %138 = vmatprep.mubr.f32.mxu0 0.0
  %139 = vmatmul.mubr.f32.gmra.mxu0 %v63
  %v140 = vpop.f32.mrf.mxu0
  %v141 = vadd.f32 %v56, %v140
  %v142 = vpop.f32.mrf.mxu0
  %143 = vdwg.mxu0
  %v144 = vtanh.pop %v136
  %v145 = vtanh.pop %v141
  %v146 = vld [vmem:[%s4] sm:$0xff]
  %v147 = vld [vmem:[%s4 + $0x8] sm:$0xff]
  %v148 = vld [vmem:[%s4 + $0x10] sm:$0xff]
  %v149 = vld [vmem:[%s4 + $0x18] sm:$0xff]
  %v150 = vld [vmem:[%s5] sm:$0x1]
  %v152 = vlaneseq
  %v153 = vshrl.u32 %v152, 7
  %v154 = vsub.s32 0, %v153
  %v155 = vrot.slane %v150, %v154
  %vm157 = vcmask 261120
  %v159 = vsel %vm157, %v144, 0
  %v162 = vsel %vm157, %v145, 0
  %164 = vmatprep.subr.mxu0 0.0
  %165 = vmatpush1.msra.mxu0 0.0
  %166 = vmatprep.subr.mxu0 0.0
  %167 = vmatpush1.msra.mxu0 0.0
  %168 = vmatprep.subr.mxu0 0.0
  %169 = vmatpush1.msra.mxu0 0.0
  %170 = vmatprep.subr.mxu0 0.0
  %171 = vmatpush1.msra.mxu0 0.0
  %172 = vmatprep.subr.mxu0 0.0
  %173 = vmatpush1.msra.mxu0 0.0
  %174 = vmatprep.subr.mxu0 0.0
  %175 = vmatpush1.msra.mxu0 0.0
  %176 = vmatprep.subr.mxu0 0.0
  %177 = vmatpush1.msra.mxu0 0.0
  %178 = vmatprep.subr.mxu0 0.0
  %179 = vmatpush1.msra.mxu0 0.0
  %180 = vmatprep.subr.mxu0 0.0
  %181 = vmatpush1.msra.mxu0 0.0
  %182 = vmatprep.subr.mxu0 0.0
  %183 = vmatpush1.msra.mxu0 0.0
  %184 = vmatprep.subr.mxu0 0.0
  %185 = vmatpush1.msra.mxu0 0.0
  %186 = vmatprep.subr.mxu0 0.0
  %187 = vmatpush1.msra.mxu0 0.0
  %188 = vmatprep.subr.mxu0 0.0
  %189 = vmatpush1.msra.mxu0 %v149
  %190 = vmatprep.subr.mxu0 0.0
  %191 = vmatpush1.msra.mxu0 %v148
  %192 = vmatprep.subr.mxu0 0.0
  %193 = vmatpush1.msra.mxu0 %v147
  %194 = vmatprep.subr.mxu0 0.0
  %195 = vmatpush1.msra.mxu0 %v146
  %196 = vmatprep.subr.mxu0 0.0
  %197 = vmatpush2.msra.mxu0 0.0
  %198 = vmatprep.subr.mxu0 0.0
  %199 = vmatpush2.msra.mxu0 0.0
  %200 = vmatprep.subr.mxu0 0.0
  %201 = vmatpush2.msra.mxu0 0.0
  %202 = vmatprep.subr.mxu0 0.0
  %203 = vmatpush2.msra.mxu0 0.0
  %204 = vmatprep.subr.mxu0 0.0
  %205 = vmatpush2.msra.mxu0 0.0
  %206 = vmatprep.subr.mxu0 0.0
  %207 = vmatpush2.msra.mxu0 0.0
  %208 = vmatprep.subr.mxu0 0.0
  %209 = vmatpush2.msra.mxu0 0.0
  %210 = vmatprep.subr.mxu0 0.0
  %211 = vmatpush2.msra.mxu0 0.0
  %212 = vmatprep.subr.mxu0 0.0
  %213 = vmatpush2.msra.mxu0 0.0
  %214 = vmatprep.subr.mxu0 0.0
  %215 = vmatpush2.msra.mxu0 0.0
  %216 = vmatprep.subr.mxu0 0.0
  %217 = vmatpush2.msra.mxu0 0.0
  %218 = vmatprep.subr.mxu0 0.0
  %219 = vmatpush2.msra.mxu0 0.0
  %220 = vmatprep.subr.mxu0 0.0
  %221 = vmatpush2.msra.mxu0 0.0
  %222 = vmatprep.subr.mxu0 0.0
  %223 = vmatpush2.msra.mxu0 0.0
  %224 = vmatprep.subr.mxu0 0.0
  %225 = vmatpush2.msra.mxu0 0.0
  %226 = vmatprep.subr.mxu0 0.0
  %227 = vmatpush2.msra.mxu0 0.0
  %228 = vmatprep.mubr.f32.mxu0 0.0
  %229 = vmatmul.mubr.f32.gmra.mxu0 %v159
  %v230 = vpop.f32.mrf.mxu0
  %v231 = vadd.f32 %v155, %v230
  %v232 = vpop.f32.mrf.mxu0
  %233 = vmatprep.mubr.f32.mxu0 0.0
  %234 = vmatmul.mubr.f32.gmra.mxu0 %v162
  %v235 = vpop.f32.mrf.mxu0
  %v236 = vadd.f32 %v155, %v235
  %v237 = vpop.f32.mrf.mxu0
  %238 = vdwg.mxu0
  %vm239 = vcmask 31744
  %v240 = vsel %vm239, %v231, -inf
  %241 = vmax.xlane.f32.xlu0 %v240
  %v242 = vpop.xlane.xlu0 %241
  %v243 = vsel %vm239, %v236, -inf
  %244 = vmax.xlane.f32.xlu0 %v243
  %v245 = vpop.xlane.xlu0 %244
  %v246 = vsub.f32 %v231, %v242
  %v247 = vsub.f32 %v236, %v245
  %v248 = vmul.f32 %v246, 1.442695
  %v249 = vpow.pop %v248
  %v250 = vmul.f32 %v247, 1.442695
  %v251 = vpow.pop %v250
  %v252 = vsel %vm239, %v249, 0.0
  %253 = vadd.xlane.f32.xlu0 %v252
  %v254 = vpop.xlane.xlu0 %253
  %v255 = vsel %vm239, %v251, 0.0
  %256 = vadd.xlane.f32.xlu0 %v255
  %v257 = vpop.xlane.xlu0 %256
  %v258 = vrcp.pop %v254
  %v259 = vrcp.pop %v257
  %v260 = vmul.f32 %v249, %v258
  %v261 = vmul.f32 %v251, %v259
  %262 = vrot.lane.b32.xlu0 %v48, 122
  %v263 = vpop.permute.xlu0 %262
  %264 = vrot.lane.b32.xlu0 %v49, 122
  %v265 = vpop.permute.xlu0 %264
  %v268 = vadd.f32 %v231, %v263
  %v269 = vadd.f32 %v236, %v265
  %v270 = vstv %s47
  %v271 = vmul.f32 %v268, %v270
  %v272 = vmul.f32 %v269, %v270
  %v273 = vsel %vm239, %v271, -inf
  %274 = vmax.xlane.f32.xlu0 %v273
  %v275 = vpop.xlane.xlu0 %274
  %v276 = vsel %vm239, %v272, -inf
  %277 = vmax.xlane.f32.xlu0 %v276
  %v278 = vpop.xlane.xlu0 %277
  %v279 = vsub.f32 %v271, %v275
  %v280 = vsub.f32 %v272, %v278
  %v281 = vmul.f32 %v279, 1.442695
  %v282 = vpow.pop %v281
  %v283 = vmul.f32 %v280, 1.442695
  %v284 = vpow.pop %v283
  %v285 = vsel %vm239, %v282, 0.0
  %286 = vadd.xlane.f32.xlu0 %v285
  %v287 = vpop.xlane.xlu0 %286
  %v288 = vsel %vm239, %v284, 0.0
  %289 = vadd.xlane.f32.xlu0 %v288
  %v290 = vpop.xlane.xlu0 %289
  %v291 = vrcp.pop %v287
  %v292 = vrcp.pop %v290
  %v293 = vmul.f32 %v282, %v291
  %v294 = vmul.f32 %v284, %v292
  %vm295 = vcmask 64544
  %v296 = vsel %vm295, %v231, -inf
  %297 = vmax.xlane.f32.xlu0 %v296
  %v298 = vpop.xlane.xlu0 %297
  %v299 = vsel %vm295, %v236, -inf
  %300 = vmax.xlane.f32.xlu0 %v299
  %v301 = vpop.xlane.xlu0 %300
  %v302 = vsub.f32 %v231, %v298
  %v303 = vsub.f32 %v236, %v301
  %v304 = vmul.f32 %v302, 1.442695
  %v305 = vpow.pop %v304
  %v306 = vmul.f32 %v303, 1.442695
  %v307 = vpow.pop %v306
  %310 = vrot.lane.b32.xlu0 %v305, 124
  %v311 = vpop.permute.xlu0 %310
  %312 = vrot.lane.b32.xlu0 %v307, 124
  %v313 = vpop.permute.xlu0 %312
  %v316 = vsel %vm239, %v311, 0.0
  %317 = vadd.xlane.f32.xlu0 %v316
  %v318 = vpop.xlane.xlu0 %317
  %v319 = vsel %vm239, %v313, 0.0
  %320 = vadd.xlane.f32.xlu0 %v319
  %v321 = vpop.xlane.xlu0 %320
  %v322 = vrcp.pop %v318
  %v323 = vrcp.pop %v321
  %v324 = vmul.f32 %v305, %v322
  %v325 = vmul.f32 %v307, %v323
  %v326 = vsel %vm295, %v271, -inf
  %327 = vmax.xlane.f32.xlu0 %v326
  %v328 = vpop.xlane.xlu0 %327
  %v329 = vsel %vm295, %v272, -inf
  %330 = vmax.xlane.f32.xlu0 %v329
  %v331 = vpop.xlane.xlu0 %330
  %v332 = vsub.f32 %v271, %v328
  %v333 = vsub.f32 %v272, %v331
  %v334 = vmul.f32 %v332, 1.442695
  %v335 = vpow.pop %v334
  %v336 = vmul.f32 %v333, 1.442695
  %v337 = vpow.pop %v336
  %340 = vrot.lane.b32.xlu0 %v335, 124
  %v341 = vpop.permute.xlu0 %340
  %342 = vrot.lane.b32.xlu0 %v337, 124
  %v343 = vpop.permute.xlu0 %342
  %v346 = vsel %vm239, %v341, 0.0
  %347 = vadd.xlane.f32.xlu0 %v346
  %v348 = vpop.xlane.xlu0 %347
  %v349 = vsel %vm239, %v343, 0.0
  %350 = vadd.xlane.f32.xlu0 %v349
  %v351 = vpop.xlane.xlu0 %350
  %v352 = vrcp.pop %v348
  %v353 = vrcp.pop %v351
  %v354 = vmul.f32 %v335, %v352
  %v355 = vmul.f32 %v337, %v353
  %v356 = vsel %vm239, %v260, %v324
  %v357 = vsel %vm239, %v261, %v325
  %358 = vrot.lane.b32.xlu0 %v48, 4
  %v359 = vpop.permute.xlu0 %358
  %360 = vrot.lane.b32.xlu0 %v49, 4
  %v361 = vpop.permute.xlu0 %360
  %v364 = vsel %vm239, %v293, %v354
  %v365 = vsel %vm239, %v294, %v355
  %vm366 = vcmask 64512
  %v367 = vsel %vm366, %v364, %v359
  %v368 = vsel %vm366, %v365, %v361
  %v369 = vld [vmem:[%s8] sm:$0xff]
  %v370 = vld [vmem:[%s8 + $0x8] sm:$0x1]
  %v371 = vld [vmem:[%s9] sm:$0x1]
  %v373 = vlaneseq
  %v374 = vshrl.u32 %v373, 7
  %v375 = vsub.s32 0, %v374
  %v376 = vrot.slane %v371, %v375
  %vm378 = vcmask 72704
  %v380 = vsel %vm378, %v367, 0
  %v383 = vsel %vm378, %v368, 0
  %vm385 = vcmask 1040384
  %v387 = vsel %vm385, %v370, 0
  %389 = vmatprep.subr.mxu0 0.0
  %390 = vmatpush1.msra.mxu0 0.0
  %391 = vmatprep.subr.mxu0 0.0
  %392 = vmatpush1.msra.mxu0 0.0
  %393 = vmatprep.subr.mxu0 0.0
  %394 = vmatpush1.msra.mxu0 0.0
  %395 = vmatprep.subr.mxu0 0.0
  %396 = vmatpush1.msra.mxu0 0.0
  %397 = vmatprep.subr.mxu0 0.0
  %398 = vmatpush1.msra.mxu0 0.0
  %399 = vmatprep.subr.mxu0 0.0
  %400 = vmatpush1.msra.mxu0 0.0
  %401 = vmatprep.subr.mxu0 0.0
  %402 = vmatpush1.msra.mxu0 0.0
  %403 = vmatprep.subr.mxu0 0.0
  %404 = vmatpush1.msra.mxu0 0.0
  %405 = vmatprep.subr.mxu0 0.0
  %406 = vmatpush1.msra.mxu0 0.0
  %407 = vmatprep.subr.mxu0 0.0
  %408 = vmatpush1.msra.mxu0 0.0
  %409 = vmatprep.subr.mxu0 0.0
  %410 = vmatpush1.msra.mxu0 0.0
  %411 = vmatprep.subr.mxu0 0.0
  %412 = vmatpush1.msra.mxu0 0.0
  %413 = vmatprep.subr.mxu0 0.0
  %414 = vmatpush1.msra.mxu0 0.0
  %415 = vmatprep.subr.mxu0 0.0
  %416 = vmatpush1.msra.mxu0 0.0
  %417 = vmatprep.subr.mxu0 0.0
  %418 = vmatpush1.msra.mxu0 %v387
  %419 = vmatprep.subr.mxu0 0.0
  %420 = vmatpush1.msra.mxu0 %v369
  %421 = vmatprep.subr.mxu0 0.0
  %422 = vmatpush2.msra.mxu0 0.0
  %423 = vmatprep.subr.mxu0 0.0
  %424 = vmatpush2.msra.mxu0 0.0
  %425 = vmatprep.subr.mxu0 0.0
  %426 = vmatpush2.msra.mxu0 0.0
  %427 = vmatprep.subr.mxu0 0.0
  %428 = vmatpush2.msra.mxu0 0.0
  %429 = vmatprep.subr.mxu0 0.0
  %430 = vmatpush2.msra.mxu0 0.0
  %431 = vmatprep.subr.mxu0 0.0
  %432 = vmatpush2.msra.mxu0 0.0
  %433 = vmatprep.subr.mxu0 0.0
  %434 = vmatpush2.msra.mxu0 0.0
  %435 = vmatprep.subr.mxu0 0.0
  %436 = vmatpush2.msra.mxu0 0.0
  %437 = vmatprep.subr.mxu0 0.0
  %438 = vmatpush2.msra.mxu0 0.0
  %439 = vmatprep.subr.mxu0 0.0
  %440 = vmatpush2.msra.mxu0 0.0
  %441 = vmatprep.subr.mxu0 0.0
  %442 = vmatpush2.msra.mxu0 0.0
  %443 = vmatprep.subr.mxu0 0.0
  %444 = vmatpush2.msra.mxu0 0.0
  %445 = vmatprep.subr.mxu0 0.0
  %446 = vmatpush2.msra.mxu0 0.0
  %447 = vmatprep.subr.mxu0 0.0
  %448 = vmatpush2.msra.mxu0 0.0
  %449 = vmatprep.subr.mxu0 0.0
  %450 = vmatpush2.msra.mxu0 0.0
  %451 = vmatprep.subr.mxu0 0.0
  %452 = vmatpush2.msra.mxu0 0.0
  %453 = vmatprep.mubr.f32.mxu0 0.0
  %454 = vmatmul.mubr.f32.gmra.mxu0 %v380
  %v455 = vpop.f32.mrf.mxu0
  %v456 = vadd.f32 %v376, %v455
  %v457 = vpop.f32.mrf.mxu0
  %458 = vmatprep.mubr.f32.mxu0 0.0
  %459 = vmatmul.mubr.f32.gmra.mxu0 %v383
  %v460 = vpop.f32.mrf.mxu0
  %v461 = vadd.f32 %v376, %v460
  %v462 = vpop.f32.mrf.mxu0
  %463 = vdwg.mxu0
  %v464 = vtanh.pop %v456
  %v465 = vtanh.pop %v461
  %v466 = vld [vmem:[%s10] sm:$0xff]
  %v467 = vld [vmem:[%s10 + $0x8] sm:$0xff]
  %v468 = vld [vmem:[%s10 + $0x10] sm:$0xff]
  %v469 = vld [vmem:[%s10 + $0x18] sm:$0xff]
  %v470 = vld [vmem:[%s11] sm:$0x1]
  %v472 = vlaneseq
  %v473 = vshrl.u32 %v472, 7
  %v474 = vsub.s32 0, %v473
  %v475 = vrot.slane %v470, %v474
  %v478 = vsel %vm157, %v464, 0
  %v481 = vsel %vm157, %v465, 0
  %483 = vmatprep.subr.mxu0 0.0
  %484 = vmatpush1.msra.mxu0 0.0
  %485 = vmatprep.subr.mxu0 0.0
  %486 = vmatpush1.msra.mxu0 0.0
  %487 = vmatprep.subr.mxu0 0.0
  %488 = vmatpush1.msra.mxu0 0.0
  %489 = vmatprep.subr.mxu0 0.0
  %490 = vmatpush1.msra.mxu0 0.0
  %491 = vmatprep.subr.mxu0 0.0
  %492 = vmatpush1.msra.mxu0 0.0
  %493 = vmatprep.subr.mxu0 0.0
  %494 = vmatpush1.msra.mxu0 0.0
  %495 = vmatprep.subr.mxu0 0.0
  %496 = vmatpush1.msra.mxu0 0.0
  %497 = vmatprep.subr.mxu0 0.0
  %498 = vmatpush1.msra.mxu0 0.0
  %499 = vmatprep.subr.mxu0 0.0
  %500 = vmatpush1.msra.mxu0 0.0
  %501 = vmatprep.subr.mxu0 0.0
  %502 = vmatpush1.msra.mxu0 0.0
  %503 = vmatprep.subr.mxu0 0.0
  %504 = vmatpush1.msra.mxu0 0.0
  %505 = vmatprep.subr.mxu0 0.0
  %506 = vmatpush1.msra.mxu0 0.0
  %507 = vmatprep.subr.mxu0 0.0
  %508 = vmatpush1.msra.mxu0 %v469
  %509 = vmatprep.subr.mxu0 0.0
  %510 = vmatpush1.msra.mxu0 %v468
  %511 = vmatprep.subr.mxu0 0.0
  %512 = vmatpush1.msra.mxu0 %v467
  %513 = vmatprep.subr.mxu0 0.0
  %514 = vmatpush1.msra.mxu0 %v466
  %515 = vmatprep.subr.mxu0 0.0
  %516 = vmatpush2.msra.mxu0 0.0
  %517 = vmatprep.subr.mxu0 0.0
  %518 = vmatpush2.msra.mxu0 0.0
  %519 = vmatprep.subr.mxu0 0.0
  %520 = vmatpush2.msra.mxu0 0.0
  %521 = vmatprep.subr.mxu0 0.0
  %522 = vmatpush2.msra.mxu0 0.0
  %523 = vmatprep.subr.mxu0 0.0
  %524 = vmatpush2.msra.mxu0 0.0
  %525 = vmatprep.subr.mxu0 0.0
  %526 = vmatpush2.msra.mxu0 0.0
  %527 = vmatprep.subr.mxu0 0.0
  %528 = vmatpush2.msra.mxu0 0.0
  %529 = vmatprep.subr.mxu0 0.0
  %530 = vmatpush2.msra.mxu0 0.0
  %531 = vmatprep.subr.mxu0 0.0
  %532 = vmatpush2.msra.mxu0 0.0
  %533 = vmatprep.subr.mxu0 0.0
  %534 = vmatpush2.msra.mxu0 0.0
  %535 = vmatprep.subr.mxu0 0.0
  %536 = vmatpush2.msra.mxu0 0.0
  %537 = vmatprep.subr.mxu0 0.0
  %538 = vmatpush2.msra.mxu0 0.0
  %539 = vmatprep.subr.mxu0 0.0
  %540 = vmatpush2.msra.mxu0 0.0
  %541 = vmatprep.subr.mxu0 0.0
  %542 = vmatpush2.msra.mxu0 0.0
  %543 = vmatprep.subr.mxu0 0.0
  %544 = vmatpush2.msra.mxu0 0.0
  %545 = vmatprep.subr.mxu0 0.0
  %546 = vmatpush2.msra.mxu0 0.0
  %547 = vmatprep.mubr.f32.mxu0 0.0
  %548 = vmatmul.mubr.f32.gmra.mxu0 %v478
  %v549 = vpop.f32.mrf.mxu0
  %v550 = vadd.f32 %v475, %v549
  %v551 = vpop.f32.mrf.mxu0
  %552 = vmatprep.mubr.f32.mxu0 0.0
  %553 = vmatmul.mubr.f32.gmra.mxu0 %v481
  %v554 = vpop.f32.mrf.mxu0
  %v555 = vadd.f32 %v475, %v554
  %v556 = vpop.f32.mrf.mxu0
  %557 = vdwg.mxu0
  %558 = vrot.lane.b32.xlu0 %v367, 8
  %v559 = vpop.permute.xlu0 %558
  %560 = vrot.lane.b32.xlu0 %v368, 8
  %v561 = vpop.permute.xlu0 %560
  %566 = vrot.lane.b32.xlu0 %v550, 17
  %v567 = vpop.permute.xlu0 %566
  %568 = vrot.lane.b32.xlu0 %v555, 17
  %v569 = vpop.permute.xlu0 %568
  %v572 = vsel %vm366, %v356, %v559
  %v573 = vsel %vm366, %v357, %v561
  %vm574 = vcmask 138240
  %v575 = vsel %vm574, %v572, %v567
  %v576 = vsel %vm574, %v573, %v569
  %vm577 = vcmask 203776
  %578 = vst.msk [vmem:[%s12] sm:$0xff] %vm577, %v575
  %579 = vst.msk [vmem:[%s12 + $0x8] sm:$0xff] %vm577, %v576
  %v580 = vsel %vm157, %v144, 0.0
  %v581 = vrot.slane %v580, 4
  %v582 = vadd.f32 %v580, %v581
  %v583 = vrot.slane %v582, 2
  %v584 = vadd.f32 %v582, %v583
  %v585 = vrot.slane %v584, 1
  %v586 = vadd.f32 %v584, %v585
  %v587 = vrcp.pop 8.0
  %v588 = vmul.f32 %v586, %v587
  %v589 = vsel %vm157, %v145, 0.0
  %v590 = vrot.slane %v589, 4
  %v591 = vadd.f32 %v589, %v590
  %v592 = vrot.slane %v591, 2
  %v593 = vadd.f32 %v591, %v592
  %v594 = vrot.slane %v593, 1
  %v595 = vadd.f32 %v593, %v594
  %v596 = vmul.f32 %v595, %v587
  %v597 = vsel %vm385, %v588, %v596
  %v598 = vld [vmem:[%s6] sm:$0xff]
  %v599 = vld [vmem:[%s6 + $0x8] sm:$0xff]
  %v600 = vld [vmem:[%s6 + $0x10] sm:$0xff]
  %v601 = vld [vmem:[%s6 + $0x18] sm:$0xff]
  %v602 = vld [vmem:[%s7] sm:$0x1]
  %v604 = vlaneseq
  %v605 = vshrl.u32 %v604, 7
  %v606 = vsub.s32 0, %v605
  %v607 = vrot.slane %v602, %v606
  %v610 = vsel %vm157, %v597, 0
  %612 = vmatprep.subr.mxu0 0.0
  %613 = vmatpush1.msra.mxu0 0.0
  %614 = vmatprep.subr.mxu0 0.0
  %615 = vmatpush1.msra.mxu0 0.0
  %616 = vmatprep.subr.mxu0 0.0
  %617 = vmatpush1.msra.mxu0 0.0
  %618 = vmatprep.subr.mxu0 0.0
  %619 = vmatpush1.msra.mxu0 0.0
  %620 = vmatprep.subr.mxu0 0.0
  %621 = vmatpush1.msra.mxu0 0.0
  %622 = vmatprep.subr.mxu0 0.0
  %623 = vmatpush1.msra.mxu0 0.0
  %624 = vmatprep.subr.mxu0 0.0
  %625 = vmatpush1.msra.mxu0 0.0
  %626 = vmatprep.subr.mxu0 0.0
  %627 = vmatpush1.msra.mxu0 0.0
  %628 = vmatprep.subr.mxu0 0.0
  %629 = vmatpush1.msra.mxu0 0.0
  %630 = vmatprep.subr.mxu0 0.0
  %631 = vmatpush1.msra.mxu0 0.0
  %632 = vmatprep.subr.mxu0 0.0
  %633 = vmatpush1.msra.mxu0 0.0
  %634 = vmatprep.subr.mxu0 0.0
  %635 = vmatpush1.msra.mxu0 0.0
  %636 = vmatprep.subr.mxu0 0.0
  %637 = vmatpush1.msra.mxu0 %v601
  %638 = vmatprep.subr.mxu0 0.0
  %639 = vmatpush1.msra.mxu0 %v600
  %640 = vmatprep.subr.mxu0 0.0
  %641 = vmatpush1.msra.mxu0 %v599
  %642 = vmatprep.subr.mxu0 0.0
  %643 = vmatpush1.msra.mxu0 %v598
  %644 = vmatprep.subr.mxu0 0.0
  %645 = vmatpush2.msra.mxu0 0.0
  %646 = vmatprep.subr.mxu0 0.0
  %647 = vmatpush2.msra.mxu0 0.0
  %648 = vmatprep.subr.mxu0 0.0
  %649 = vmatpush2.msra.mxu0 0.0
  %650 = vmatprep.subr.mxu0 0.0
  %651 = vmatpush2.msra.mxu0 0.0
  %652 = vmatprep.subr.mxu0 0.0
  %653 = vmatpush2.msra.mxu0 0.0
  %654 = vmatprep.subr.mxu0 0.0
  %655 = vmatpush2.msra.mxu0 0.0
  %656 = vmatprep.subr.mxu0 0.0
  %657 = vmatpush2.msra.mxu0 0.0
  %658 = vmatprep.subr.mxu0 0.0
  %659 = vmatpush2.msra.mxu0 0.0
  %660 = vmatprep.subr.mxu0 0.0
  %661 = vmatpush2.msra.mxu0 0.0
  %662 = vmatprep.subr.mxu0 0.0
  %663 = vmatpush2.msra.mxu0 0.0
  %664 = vmatprep.subr.mxu0 0.0
  %665 = vmatpush2.msra.mxu0 0.0
  %666 = vmatprep.subr.mxu0 0.0
  %667 = vmatpush2.msra.mxu0 0.0
  %668 = vmatprep.subr.mxu0 0.0
  %669 = vmatpush2.msra.mxu0 0.0
  %670 = vmatprep.subr.mxu0 0.0
  %671 = vmatpush2.msra.mxu0 0.0
  %672 = vmatprep.subr.mxu0 0.0
  %673 = vmatpush2.msra.mxu0 0.0
  %674 = vmatprep.subr.mxu0 0.0
  %675 = vmatpush2.msra.mxu0 0.0
  %676 = vmatprep.mubr.f32.mxu0 0.0
  %677 = vmatmul.mubr.f32.gmra.mxu0 %v610
  %v678 = vpop.f32.mrf.mxu0
  %v679 = vadd.f32 %v607, %v678
  %v680 = vpop.f32.mrf.mxu0
  %681 = vdwg.mxu0
  %vm682 = vcmask 25600
  %v683 = vsel %vm682, %v679, -inf
  %684 = vmax.xlane.f32.xlu0 %v683
  %v685 = vpop.xlane.xlu0 %684
  %v686 = vsub.f32 %v679, %v685
  %v687 = vmul.f32 %v686, 1.442695
  %v688 = vpow.pop %v687
  %v689 = vsel %vm682, %v688, 0.0
  %690 = vadd.xlane.f32.xlu0 %v689
  %v691 = vpop.xlane.xlu0 %690
  %v692 = vrcp.pop %v691
  %v693 = vmul.f32 %v688, %v692
  %vm694 = vcmask 58400
  %v695 = vsel %vm694, %v679, -inf
  %696 = vmax.xlane.f32.xlu0 %v695
  %v697 = vpop.xlane.xlu0 %696
  %v698 = vsub.f32 %v679, %v697
  %v699 = vmul.f32 %v698, 1.442695
  %v700 = vpow.pop %v699
  %702 = vrot.lane.b32.xlu0 %v700, 124
  %v703 = vpop.permute.xlu0 %702
  %v705 = vsel %vm682, %v703, 0.0
  %706 = vadd.xlane.f32.xlu0 %v705
  %v707 = vpop.xlane.xlu0 %706
  %v708 = vrcp.pop %v707
  %v709 = vmul.f32 %v700, %v708
  %v710 = vsel %vm239, %v693, %v709
  %vm711 = vcmask 58368
  %712 = vst.msk [vmem:[%s13] sm:$0x3] %vm711, %v710
  // Predicated region
  $region50: #{vaemjp_forward.1} parent=0 // pred_check
    _
  $region51: #{vaemjp_forward.1} parent=0 // pred_check_branch
    %714 = sbr.rel (0) target = $region53
  $region52: #{vaemjp_forward.1} parent=0 // pred_region
    _
  $region53: #{vaemjp_forward.1} parent=0 // pred_fallthru
    _
  // Predicated region
  $region54: #{vaemjp_forward.1} parent=0 // pred_check
    _
  $region55: #{vaemjp_forward.1} parent=0 // pred_check_branch
    %716 = sbr.rel (0) target = $region57
  $region56: #{vaemjp_forward.1} parent=0 // pred_region
    _
  $region57: #{vaemjp_forward.1} parent=0 // pred_fallthru
    _
  // Predicated region
  $region58: #{vaemjp_forward.1} parent=0 // pred_check
    _
  $region59: #{vaemjp_forward.1} parent=0 // pred_check_branch
    %718 = sbr.rel (0) target = $region61
  $region60: #{vaemjp_forward.1} parent=0 // pred_region
    _
  $region61: #{vaemjp_forward.1} parent=0 // pred_fallthru
    _
  // Predicated region
  $region62: #{vaemjp_forward.1} parent=0 // pred_check
    _
  $region63: #{vaemjp_forward.1} parent=0 // pred_check_branch
    %720 = sbr.rel (0) target = $region65
  $region64: #{vaemjp_forward.1} parent=0 // pred_region
    _
  $region65: #{vaemjp_forward.1} parent=0 // pred_fallthru
    _

</llo_original>
